<compile_context>
chip_gen: v7x
topology: tpu7x:2x2x1
jax: 0.10.0
libtpu: 0.0.40
codegen_flags: <defaults>
</compile_context>

<pallas_src>
import math
import functools

import jax
import jax.numpy as jnp
from jax.experimental import pallas as pl
from jax.experimental.pallas import tpu as pltpu


# ---------------------------------------------------------------------------
# PE buffer construction (parameter/buffer setup == glue, plain JAX).
# Reproduces the exact (non-standard) formula from the PyTorch __init__:
#   pe[pos, i]   = sin(pos / 10000 ** (2*i     / d_model))   (even columns)
#   pe[pos, i+1] = cos(pos / 10000 ** (2*(i+1) / d_model))   (odd  columns)
# i.e. column c uses exponent 2*c/d_model with sin for even c, cos for odd c.
# ---------------------------------------------------------------------------
def build_pe(d_model: int, max_seq_len: int) -> jnp.ndarray:
    pos = jnp.arange(max_seq_len, dtype=jnp.float32)[:, None]      # (L, 1)
    col = jnp.arange(d_model, dtype=jnp.float32)[None, :]          # (1, D)
    denom = jnp.power(10000.0, 2.0 * col / d_model)                # (1, D)
    angle = pos / denom                                            # (L, D)
    even_mask = (jnp.arange(d_model) % 2) == 0
    pe = jnp.where(even_mask[None, :], jnp.sin(angle), jnp.cos(angle))
    return pe[None, :, :]                                          # (1, L, D)


# ---------------------------------------------------------------------------
# Pallas kernels. Blocks are lane-dense 2-D tiles:
#   x_ref/o_ref: (row_tile, col_tile), pe_ref: (1, col_tile) (broadcast rows).
# ---------------------------------------------------------------------------
def _posenc_eval_kernel(x_ref, pe_ref, o_ref, *, scale):
    x = x_ref[...].astype(jnp.float32)
    o_ref[...] = (x * jnp.float32(scale) + pe_ref[...]).astype(o_ref.dtype)


def _posenc_train_kernel(seed_ref, x_ref, pe_ref, o_ref, *,
                         scale, threshold, inv_keep):
    x = x_ref[...].astype(jnp.float32)
    out = x * jnp.float32(scale) + pe_ref[...]

    # Unique PRNG stream per grid tile (mix tile indices into the seed).
    pltpu.prng_seed(seed_ref[0]
                    + pl.program_id(0) * jnp.int32(1000003)
                    + pl.program_id(1) * jnp.int32(7919))
    bits = pltpu.bitcast(pltpu.prng_random_bits(out.shape), jnp.uint32)
    # keep iff uniform >= p, expressed as a raw uint32 threshold compare
    # (no shift / int->float convert needed).
    keep = bits >= jnp.uint32(threshold)
    o_ref[...] = jnp.where(keep, out * jnp.float32(inv_keep), 0.0).astype(o_ref.dtype)


# ---------------------------------------------------------------------------
# Wrapper: lane-dense reshape, VMEM-aware tiling, pallas_call.
# ---------------------------------------------------------------------------
def positional_encoder(x, pe, *, dropout_p=0.1, training=False, seed=0):
    """x: (B, S, D); pe: (1, max_seq_len, D) (as built by build_pe)."""
    B, S, D = x.shape
    L = S * D
    scale = math.sqrt(D)

    # Lane-dense 2-D views.  pe[:, :S, :] is a contiguous prefix of the buffer,
    # so this slice+reshape is a cheap view-level op (no dynamic_slice needed).
    x2 = x.reshape(B, L)
    pe2 = pe.reshape(-1, D)[:S].reshape(1, L).astype(jnp.float32)

    # ---- tile selection: biggest tiles that comfortably fit scoped VMEM ----
    # Cap each f32 tile at ~2 MiB so double-buffered x/out plus the resident pe
    # slab stay well under v5e's 16 MiB default scoped VMEM (and v7x's 64 MiB
    # physical VMEM with 2 TCs per chip).
    MAX_TILE_ELEMS = 512 * 1024                     # 2 MiB of f32
    if B * L <= MAX_TILE_ELEMS:
        row_tile, col_tile = B, L                   # whole problem in one step
    else:
        row_tile = B if B <= 512 else 512           # full dim or multiple of 8
        col_tile = min(L, max(128, (MAX_TILE_ELEMS // row_tile) // 128 * 128))

    n_row = pl.cdiv(B, row_tile)
    n_col = pl.cdiv(L, col_tile)
    # Column tiles on the slow axis, row tiles on the fast axis: the pe block
    # index is constant across the inner loop, so pe is DMA'd once per column
    # tile instead of being re-streamed every step.
    grid = (n_col, n_row)

    x_spec = pl.BlockSpec((row_tile, col_tile), lambda j, i, *_: (i, j))
    pe_spec = pl.BlockSpec((1, col_tile), lambda j, i, *_: (0, j))
    o_spec = pl.BlockSpec((row_tile, col_tile), lambda j, i, *_: (i, j))

    compiler_params = pltpu.CompilerParams(
        dimension_semantics=("parallel", "parallel"),
        vmem_limit_bytes=32 * 1024 * 1024,
    )
    out_shape = jax.ShapeDtypeStruct((B, L), x.dtype)

    if training and dropout_p > 0.0:
        # TODO(synk): dropout mask uses the TPU hardware PRNG; it cannot
        # bit-match torch's RNG stream (semantics/scaling are identical).
        threshold = min(int(round(dropout_p * (1 << 32))), (1 << 32) - 1)
        kernel = functools.partial(
            _posenc_train_kernel, scale=scale,
            threshold=threshold, inv_keep=1.0 / (1.0 - dropout_p))
        out2 = pl.pallas_call(
            kernel,
            out_shape=out_shape,
            grid_spec=pltpu.PrefetchScalarGridSpec(
                num_scalar_prefetch=1,
                grid=grid,
                in_specs=[x_spec, pe_spec],
                out_specs=o_spec),
            compiler_params=compiler_params,
        )(jnp.array([seed], dtype=jnp.int32), x2, pe2)
    else:
        # Eval path: no scalar prefetch, no PRNG — just scale + add.
        kernel = functools.partial(_posenc_eval_kernel, scale=scale)
        out2 = pl.pallas_call(
            kernel,
            out_shape=out_shape,
            grid_spec=pltpu.PrefetchScalarGridSpec(
                num_scalar_prefetch=0,
                grid=grid,
                in_specs=[x_spec, pe_spec],
                out_specs=o_spec),
            compiler_params=compiler_params,
        )(x2, pe2)

    return out2.reshape(B, S, D)


if __name__ == "__main__":
    d_model = 32
    max_seq_len = 200
    batch = 2
    seq_len = 8

    key = jax.random.PRNGKey(0)
    x = jax.random.normal(key, (batch, seq_len, d_model), dtype=jnp.float32)
    pe = build_pe(d_model, max_seq_len)

    # Eval mode (dropout = identity), matching module.eval() behaviour.
    out = positional_encoder(x, pe, dropout_p=0.1, training=False)
    out = jax.block_until_ready(out)

    # Pure-JAX reference of the forward-pass semantics.
    ref = x * math.sqrt(d_model) + pe[:, :seq_len, :]
    assert out.shape == (batch, seq_len, d_model)
    assert jnp.allclose(out, ref, atol=1e-5, rtol=1e-5), "mismatch vs reference"

    print("KERNEL_OK")
</pallas_src>

<mosaic_0001>
module attributes {stable_mosaic.version = 11 : i64} {
  func.func @_posenc_eval_kernel(%arg0: i32, %arg1: i32, %arg2: memref<2x256xf32, #tpu.memory_space<vmem>>, %arg3: memref<1x256xf32, #tpu.memory_space<vmem>>, %arg4: memref<2x256xf32, #tpu.memory_space<vmem>>) attributes {dimension_semantics = [#tpu.dimension_semantics<parallel>, #tpu.dimension_semantics<parallel>], iteration_bounds = array<i64: 1, 1>, scalar_prefetch = 0 : i64, scratch_operands = 0 : i64, tpu.core_type = #tpu.core_type<tc>, window_params = [{transform_indices = @transform_0, window_bounds = array<i64: 2, 256>}, {transform_indices = @transform_1, window_bounds = array<i64: 1, 256>}, {transform_indices = @transform_2, window_bounds = array<i64: 2, 256>}]} {
    %c0 = arith.constant 0 : index
    %c0_0 = arith.constant 0 : index
    %0 = vector.load %arg2[%c0, %c0_0] : memref<2x256xf32, #tpu.memory_space<vmem>>, vector<2x256xf32>
    %cst = arith.constant 5.65685415 : f32
    %1 = vector.broadcast %cst : f32 to vector<2x256xf32>
    %2 = arith.mulf %0, %1 : vector<2x256xf32>
    %c0_1 = arith.constant 0 : index
    %c0_2 = arith.constant 0 : index
    %3 = vector.load %arg3[%c0_1, %c0_2] : memref<1x256xf32, #tpu.memory_space<vmem>>, vector<1x256xf32>
    %4 = vector.broadcast %3 : vector<1x256xf32> to vector<2x256xf32>
    %5 = arith.addf %2, %4 : vector<2x256xf32>
    %c0_3 = arith.constant 0 : index
    %c0_4 = arith.constant 0 : index
    %6 = vector.load %arg4[%c0_3, %c0_4] : memref<2x256xf32, #tpu.memory_space<vmem>>, vector<2x256xf32>
    tpu.vector_store %arg4[%c0_3, %c0_4], %5 {strides = array<i32>} : memref<2x256xf32, #tpu.memory_space<vmem>>, vector<2x256xf32>,
    return
  }
  func.func @transform_0(%arg0: i32, %arg1: i32) -> (i32, i32) {
    %c0_i32 = arith.constant 0 : i32
    return %arg1, %arg0 : i32, i32
  }
  func.func @transform_1(%arg0: i32, %arg1: i32) -> (i32, i32) {
    %c0_i32 = arith.constant 0 : i32
    %c0_i32_0 = arith.constant 0 : i32
    return %c0_i32, %arg0 : i32, i32
  }
  func.func @transform_2(%arg0: i32, %arg1: i32) -> (i32, i32) {
    %c0_i32 = arith.constant 0 : i32
    return %arg1, %arg0 : i32, i32
  }
}

</mosaic_0001>

<llo_original>
// kernel: tpu_custom_call.1
$region0: #{tpu_custom_call.1}
  #allocation0 [shape = 'u32[]', space=smem, size = 0x4, offset = 0x4, fixed_abs, tag = 'smem constant byte address 0x4 - core index']
  #allocation1 [shape = 'u32[144,128]{1,0:T(1,128)}', space=vmem, size = 0x12000, scoped, tag = 'internal scratch']
  %s0 = inlined_call_operand.hbm [shape: f32[2,256], index: 0, kind: input, shape index: {}]
  %s1 = inlined_call_operand.vmem [shape: f32[1,256], index: 1, kind: input, shape index: {}]
  %s2 = inlined_call_operand.hbm [shape: f32[2,256], index: 2, kind: output, shape index: {}]
  %s3 = sld [smem:[#allocation0]]
  $region22: #{tpu_custom_call.1} parent=0
    _
  %s5 = ssub.s32 1, %s3
  %s6 = scalar_select 0, %s5, %s3
  $region1: #{tpu_custom_call.1} parent=0
    #allocation2 [shape = 'u8[2048]{0}', space=vmem, size = 0x800, scoped, tag = 'input window, operand 0, single buffered']
    #allocation3 [shape = 's32[1]{0}', space=sflag, size = 0x4, scoped, tag = 'scoped memory for tpu_custom_call.1']
    #allocation4 [shape = 's32[1]{0}', space=sflag, size = 0x4, scoped, tag = 'scoped memory for tpu_custom_call.1']
    #allocation5 [shape = 'u8[2048]{0}', space=vmem, size = 0x800, scoped, tag = 'output window, operand 0, single buffered']
    %7 = vsyncpa [#allocation3], 0
    %8 = vsyncpa [#allocation4], 0
    // Predicated region
    $region2: #{tpu_custom_call.1} parent=1 // pred_check
      _
    $region3: #{tpu_custom_call.1} parent=1 // pred_check_branch
      %10 = sbr.rel (0) target = $region5
    $region4: #{tpu_custom_call.1} parent=1 // pred_region
      %s12 = ssub.s32 64, 64
      %13 = vsyncadd [#allocation3], %s12
      %s15 = sshll.u32 [#allocation2], 4
      %s16 = int_to_ptr.vmem [resolvable:$true] %s15
      %18 = dma.hbm_to_vmem [thread:$0]  %s0, 64, %s16, [#allocation3]
    $region5: #{tpu_custom_call.1} parent=1 // pred_fallthru
      _
    // Predicated region
    $region6: #{tpu_custom_call.1} parent=1 // pred_check
      _
    $region7: #{tpu_custom_call.1} parent=1 // pred_check_branch
      %20 = sbr.rel (0) target = $region9
    $region8: #{tpu_custom_call.1} parent=1 // pred_region
      _
    $region9: #{tpu_custom_call.1} parent=1 // pred_fallthru
      _
    // Predicated region
    $region10: #{tpu_custom_call.1} parent=1 // pred_check
      _
    $region11: #{tpu_custom_call.1} parent=1 // pred_check_branch
      %22 = sbr.rel (0) target = $region13
    $region12: #{tpu_custom_call.1} parent=1 // pred_region
      %23 = dma.done [#allocation3], 64
    $region13: #{tpu_custom_call.1} parent=1 // pred_fallthru
      _
    %v24 = vld [vmem:[#allocation2] sm:$0xf]
    %v25 = vmul.f32 %v24, 5.656854
    %v26 = vld [vmem:[%s1] sm:$0x3]
    %v28 = vlaneseq
    %v29 = vshrl.u32 %v28, 7
    %v30 = vsub.s32 0, %v29
    %v31 = vrot.slane %v26, %v30
    %v32 = vlaneseq
    %v33 = vshrl.u32 %v32, 7
    %v34 = vsub.s32 1, %v33
    %v35 = vrot.slane %v26, %v34
    %v36 = vcombine.low %v31, %v35
    %v38 = vunpack.c.l.s4 1983009808
    %v39 = vunpack.c.0.s8 %v38
    %v40 = vlaneseq
    %v41 = vshrl.u32 %v40, 7
    %v42 = vsub.s32 %v39, %v41
    %v43 = vrot.slane %v36, %v42
    %v45 = vadd.f32 %v25, %v43
    %46 = vst [vmem:[#allocation5] sm:$0xf] %v45
    // Predicated region
    $region14: #{tpu_custom_call.1} parent=1 // pred_check
      _
    $region15: #{tpu_custom_call.1} parent=1 // pred_check_branch
      %48 = sbr.rel (0) target = $region17
    $region16: #{tpu_custom_call.1} parent=1 // pred_region
      %s50 = ssub.s32 64, 64
      %51 = vsyncadd [#allocation4], %s50
      %s53 = sshll.u32 [#allocation5], 4
      %s54 = int_to_ptr.vmem [resolvable:$true] %s53
      %56 = dma.vmem_to_hbm [thread:$0]  %s54, 64, %s2, [#allocation4]
    $region17: #{tpu_custom_call.1} parent=1 // pred_fallthru
      _
    // Predicated region
    $region18: #{tpu_custom_call.1} parent=1 // pred_check
      _
    $region19: #{tpu_custom_call.1} parent=1 // pred_check_branch
      %58 = sbr.rel (0) target = $region21
    $region20: #{tpu_custom_call.1} parent=1 // pred_region
      %59 = dma.done [#allocation4], 64
    $region21: #{tpu_custom_call.1} parent=1 // pred_fallthru
      _
    %60 = vsyncpa [#allocation3], 1
    %61 = vsyncpa [#allocation4], 1

</llo_original>
